<compile_context>
chip_gen: v5e
topology: v5e:2x2
jax: 0.10.0
libtpu: 0.0.40
codegen_flags: <defaults>
</compile_context>

<pallas_src>
import math
import functools

import jax
import jax.numpy as jnp
from jax import lax
from jax.experimental import pallas as pl
from jax.experimental.pallas import tpu as pltpu


# ---------------------------------------------------------------------------
# PE table (replicates PositionalEncoding.get_pe; returns [max_len, d_model])
# ---------------------------------------------------------------------------

def build_pe_table(max_len: int, d_model: int, dtype=jnp.float32) -> jnp.ndarray:
    position = jnp.arange(max_len, dtype=jnp.float32)[:, None]            # [L, 1]
    div_term = jnp.exp(
        jnp.arange(0, d_model, 2, dtype=jnp.float32) * (-math.log(10000.0) / d_model)
    )
    sin_part = jnp.sin(position * div_term)                                # [L, ceil(D/2)]
    n_odd = d_model // 2
    # torch: pe[:, 1::2] = cos(position * div_term[-(d_model % 2):])
    cos_div = div_term if d_model % 2 == 0 else div_term[-(d_model % 2):]
    cos_part = jnp.broadcast_to(jnp.cos(position * cos_div), (max_len, n_odd))
    pe = jnp.zeros((max_len, d_model), dtype=jnp.float32)
    pe = pe.at[:, 0::2].set(sin_part)
    pe = pe.at[:, 1::2].set(cos_part)
    return pe.astype(dtype)


# ---------------------------------------------------------------------------
# In-kernel stateless dropout mask (counter-based integer hash, int32 only)
# ---------------------------------------------------------------------------

def _i32const(v: int):
    """int32 constant, accepting values given as unsigned 32-bit literals."""
    return jnp.int32(v - (1 << 32) if v >= (1 << 31) else v)


def _mix32(x):
    """lowbias32-style avalanche hash on int32 (logical shifts, wrapping mul)."""
    x = x ^ lax.shift_right_logical(x, 16)
    x = x * _i32const(0x7FEB352D)
    x = x ^ lax.shift_right_logical(x, 15)
    x = x * _i32const(0x846CA68B)
    x = x ^ lax.shift_right_logical(x, 16)
    return x


def _dropout_keep_mask(counter_i32, seed_i32, keep_prob: float):
    """Boolean keep-mask: hash(counter, seed) compared at 24-bit granularity."""
    thresh24 = min(int(round(keep_prob * float(1 << 24))), (1 << 24) - 1)
    h = _mix32(counter_i32 ^ (seed_i32 * _i32const(0x9E3779B9)))
    h24 = lax.shift_right_logical(h, 8)          # uniform in [0, 2^24)
    return h24 < jnp.int32(thresh24)


# ---------------------------------------------------------------------------
# Kernels — lane-dense collapsed layout [S, B*D]  (used when D % 128 == 0)
# ---------------------------------------------------------------------------

def _pe_add_lane_kernel(x_ref, pe_ref, o_ref, *, reps: int):
    # x_ref: [TS, reps*D], pe_ref: [TS, D]; replicate pe across batches in-lane.
    o_ref[...] = x_ref[...] + jnp.tile(pe_ref[...], (1, reps))


def _pe_add_lane_dropout_kernel(seed_ref, x_ref, pe_ref, o_ref, *,
                                reps: int, keep_prob: float, bd_total: int):
    y = x_ref[...] + jnp.tile(pe_ref[...], (1, reps))
    ts, tc = y.shape
    i = pl.program_id(0)
    j = pl.program_id(1)
    rows = lax.broadcasted_iota(jnp.int32, (ts, tc), 0) + i * ts
    cols = lax.broadcasted_iota(jnp.int32, (ts, tc), 1) + j * tc
    counter = rows * jnp.int32(bd_total) + cols          # unique per element
    keep = _dropout_keep_mask(counter, seed_ref[0], keep_prob)
    o_ref[...] = jnp.where(keep, y * (1.0 / keep_prob),
                           jnp.zeros_like(y)).astype(o_ref.dtype)


# ---------------------------------------------------------------------------
# Kernels — 3-D broadcast layout [S, B, D]  (used when D % 128 != 0)
# ---------------------------------------------------------------------------

def _pe_add_bcast_kernel(x_ref, pe_ref, o_ref):
    # x_ref: [TS, TB, D], pe_ref: [TS, 1, D] -> broadcast over batch (sublanes).
    o_ref[...] = x_ref[...] + pe_ref[...]


def _pe_add_bcast_dropout_kernel(seed_ref, x_ref, pe_ref, o_ref, *,
                                 keep_prob: float, b_total: int, d_total: int):
    y = x_ref[...] + pe_ref[...]
    ts, tb, d = y.shape
    i = pl.program_id(0)
    j = pl.program_id(1)
    rows = lax.broadcasted_iota(jnp.int32, (ts, tb, d), 0) + i * ts
    bats = lax.broadcasted_iota(jnp.int32, (ts, tb, d), 1) + j * tb
    cols = lax.broadcasted_iota(jnp.int32, (ts, tb, d), 2)
    counter = (rows * jnp.int32(b_total) + bats) * jnp.int32(d_total) + cols
    keep = _dropout_keep_mask(counter, seed_ref[0], keep_prob)
    o_ref[...] = jnp.where(keep, y * (1.0 / keep_prob),
                           jnp.zeros_like(y)).astype(o_ref.dtype)


# ---------------------------------------------------------------------------
# Tiling heuristics
# ---------------------------------------------------------------------------

_VMEM_LIMIT_BYTES = 48 * 1024 * 1024     # < v7x 64 MiB physical; plenty on v5e/v6e
_X_BLOCK_BYTES_EVAL = 8 * 1024 * 1024    # ~8 MiB of x per grid step (streaming add)
_X_BLOCK_BYTES_DROPOUT = 4 * 1024 * 1024 # dropout has ~3-4x block of transients
_TINY_INPUT_BYTES = 256 * 1024           # below this, fused XLA add is cheaper
_SPLIT_MIN_BYTES = 1 * 1024 * 1024       # force >=2 grid steps above this (v7x)


def _ceil_div(a: int, b: int) -> int:
    return -(-a // b)


def _sublane_pack(itemsize: int) -> int:
    # sublane packing multiple: 8 for 4-byte, 16 for 2-byte, 32 for 1-byte dtypes
    return 8 * max(1, 4 // max(1, itemsize))


def _choose_lane_tiles(S, B, D, itemsize, block_bytes):
    """Tiles for the collapsed [S, B*D] layout: returns (ts, reps)."""
    pack = _sublane_pack(itemsize)
    d_bytes = D * itemsize
    row_bytes = B * d_bytes
    total = S * row_bytes
    if pack * row_bytes <= block_bytes or B == 1:
        reps = B
        ts = max(1, block_bytes // row_bytes)
        if ts >= S:
            ts = S
        else:
            ts = max(pack, (ts // pack) * pack)
    else:
        reps = max(1, min(B, block_bytes // (pack * d_bytes)))
        ts = min(S, pack)
    # Guarantee >=2 grid steps for medium/large inputs (v7x two TCs, pipelining).
    if total >= _SPLIT_MIN_BYTES and _ceil_div(S, ts) * _ceil_div(B, reps) < 2:
        if S >= 2 * pack:
            half = _ceil_div(S, 2)
            ts_new = _ceil_div(half, pack) * pack
            if ts_new < S:
                ts = ts_new
        elif B >= 2:
            reps = max(1, _ceil_div(reps, 2))
    return ts, reps


def _choose_bcast_tiles(S, B, D, itemsize, block_bytes):
    """Tiles for the 3-D [S, B, D] layout: returns (ts, tb)."""
    pack = _sublane_pack(itemsize)
    d_bytes = D * itemsize
    row_bytes = B * d_bytes
    total = S * row_bytes
    if row_bytes <= block_bytes or B == 1:
        tb = B
        ts = max(1, min(S, block_bytes // max(1, row_bytes)))
    else:
        ts = 1
        tb = max(pack, (block_bytes // d_bytes // pack) * pack)
        if tb >= B:
            tb = B
    if total >= _SPLIT_MIN_BYTES and _ceil_div(S, ts) * _ceil_div(B, tb) < 2 and S >= 2:
        ts = _ceil_div(S, 2)     # third-minor dim: no packing constraint
    return ts, tb


# ---------------------------------------------------------------------------
# Wrapper
# ---------------------------------------------------------------------------

def positional_encoding_forward(
    x: jnp.ndarray,
    pe_table: jnp.ndarray,
    *,
    dropout_p: float = 0.1,
    training: bool = False,
    seed: int = 0,
    force_pallas: bool = False,
) -> jnp.ndarray:
    """x: [S, B, D]; pe_table: [max_len, D]; returns dropout(x + pe[:S])."""
    S, B, D = x.shape
    pe = pe_table[:S].astype(x.dtype)                       # [S, D]
    apply_dropout = bool(training) and dropout_p > 0.0
    keep_prob = 1.0 - float(dropout_p)
    itemsize = x.dtype.itemsize
    total_bytes = x.size * itemsize

    # XLA fallback: tiny inputs, or small non-128-aligned D (masked stores hurt
    # small transfers the most).  x + broadcast(pe) fuses to a single HBM pass.
    xla_fallback = total_bytes < _TINY_INPUT_BYTES or (
        D % 128 != 0 and total_bytes < 4 * _TINY_INPUT_BYTES
    )
    if (not force_pallas) and xla_fallback:
        y = x + pe[:, None, :]
        if apply_dropout:
            mask = jax.random.bernoulli(jax.random.PRNGKey(seed), keep_prob, y.shape)
            y = jnp.where(mask, y / keep_prob, 0.0).astype(x.dtype)
        return y

    block_bytes = _X_BLOCK_BYTES_DROPOUT if apply_dropout else _X_BLOCK_BYTES_EVAL
    cparams = pltpu.CompilerParams(
        dimension_semantics=("parallel", "parallel"),   # shards across v7x's 2 TCs
        vmem_limit_bytes=_VMEM_LIMIT_BYTES,
    )
    # TODO(synk): callers should thread a fresh `seed` per training step to avoid
    # reusing the same dropout mask across invocations.
    seed_arr = jnp.asarray([seed], dtype=jnp.int32)
    smem_spec = pl.BlockSpec(memory_space=pltpu.MemorySpace.SMEM)

    if D % 128 == 0:
        # Lane-dense collapsed view [S, B*D]; lane tile = reps*D (multiple of 128).
        BD = B * D
        x2 = x.reshape(S, BD)
        ts, reps = _choose_lane_tiles(S, B, D, itemsize, block_bytes)
        tc = reps * D
        grid = (_ceil_div(S, ts), _ceil_div(B, reps))
        x_spec = pl.BlockSpec((ts, tc), lambda i, j: (i, j))
        pe_spec = pl.BlockSpec((ts, D), lambda i, j: (i, 0))
        out_spec = pl.BlockSpec((ts, tc), lambda i, j: (i, j))
        out_shape = jax.ShapeDtypeStruct((S, BD), x.dtype)
        if not apply_dropout:
            y2 = pl.pallas_call(
                functools.partial(_pe_add_lane_kernel, reps=reps),
                out_shape=out_shape, grid=grid,
                in_specs=[x_spec, pe_spec], out_specs=out_spec,
                input_output_aliases={0: 0},
                compiler_params=cparams,
            )(x2, pe)
        else:
            y2 = pl.pallas_call(
                functools.partial(_pe_add_lane_dropout_kernel,
                                  reps=reps, keep_prob=keep_prob, bd_total=BD),
                out_shape=out_shape, grid=grid,
                in_specs=[smem_spec, x_spec, pe_spec], out_specs=out_spec,
                input_output_aliases={1: 0},
                compiler_params=cparams,
            )(seed_arr, x2, pe)
        return y2.reshape(S, B, D)

    # D not 128-aligned: 3-D blocking (TS, TB, D) with sublane broadcast of pe.
    pe3 = pe.reshape(S, 1, D)
    ts, tb = _choose_bcast_tiles(S, B, D, itemsize, block_bytes)
    grid = (_ceil_div(S, ts), _ceil_div(B, tb))
    x_spec = pl.BlockSpec((ts, tb, D), lambda i, j: (i, j, 0))
    pe_spec = pl.BlockSpec((ts, 1, D), lambda i, j: (i, 0, 0))
    out_spec = pl.BlockSpec((ts, tb, D), lambda i, j: (i, j, 0))
    out_shape = jax.ShapeDtypeStruct((S, B, D), x.dtype)
    if not apply_dropout:
        y = pl.pallas_call(
            _pe_add_bcast_kernel,
            out_shape=out_shape, grid=grid,
            in_specs=[x_spec, pe_spec], out_specs=out_spec,
            input_output_aliases={0: 0},
            compiler_params=cparams,
        )(x, pe3)
    else:
        y = pl.pallas_call(
            functools.partial(_pe_add_bcast_dropout_kernel,
                              keep_prob=keep_prob, b_total=B, d_total=D),
            out_shape=out_shape, grid=grid,
            in_specs=[smem_spec, x_spec, pe_spec], out_specs=out_spec,
            input_output_aliases={1: 0},
            compiler_params=cparams,
        )(seed_arr, x, pe3)
    return y


# ---------------------------------------------------------------------------
# Demo / correctness checks
# ---------------------------------------------------------------------------

if __name__ == "__main__":
    MAX_LEN = 64
    key = jax.random.PRNGKey(0)
    keep_prob = 0.9

    def check(S, B, D, subkey):
        x = jax.random.normal(subkey, (S, B, D), dtype=jnp.float32)
        pe_tab = build_pe_table(MAX_LEN, D)
        ref = x + pe_tab[:S][:, None, :]

        # Eval mode (dropout is identity): must match the broadcast-add exactly.
        out = positional_encoding_forward(
            x, pe_tab, dropout_p=0.1, training=False, force_pallas=True
        )
        out = jax.block_until_ready(out)
        assert out.shape == (S, B, D)
        assert jnp.allclose(out, ref, atol=1e-6), f"eval mismatch for D={D}"

        # Training mode: every element is 0 or (x+pe)/keep_prob.
        out_tr = positional_encoding_forward(
            x, pe_tab, dropout_p=0.1, training=True, seed=123, force_pallas=True
        )
        out_tr = jax.block_until_ready(out_tr)
        scaled = ref / keep_prob
        ok = jnp.all(
            jnp.isclose(out_tr, 0.0, atol=1e-6)
            | jnp.isclose(out_tr, scaled, atol=1e-5, rtol=1e-5)
        )
        assert bool(ok), f"training-mode dropout inconsistent for D={D}"

    k1, k2 = jax.random.split(key)
    # Lane-dense collapsed path (D % 128 == 0): seq=8, batch=2, d_model=128.
    check(8, 2, 128, k1)
    # 3-D broadcast path (D % 128 != 0): seq=8, batch=2, d_model=32.
    check(8, 2, 32, k2)

    print("KERNEL_OK")
</pallas_src>

<mosaic_0001>
module attributes {stable_mosaic.version = 11 : i64} {
  func.func @_pe_add_lane_kernel(%arg0: i32, %arg1: i32, %arg2: memref<8x256xf32, #tpu.memory_space<vmem>>, %arg3: memref<8x128xf32, #tpu.memory_space<vmem>>, %arg4: memref<8x256xf32, #tpu.memory_space<vmem>>) attributes {dimension_semantics = [#tpu.dimension_semantics<parallel>, #tpu.dimension_semantics<parallel>], iteration_bounds = array<i64: 1, 1>, scalar_prefetch = 0 : i64, scratch_operands = 0 : i64, tpu.core_type = #tpu.core_type<tc>, window_params = [{transform_indices = @transform_0, window_bounds = array<i64: 8, 256>}, {transform_indices = @transform_1, window_bounds = array<i64: 8, 128>}, {transform_indices = @transform_2, window_bounds = array<i64: 8, 256>}]} {
    %c0 = arith.constant 0 : index
    %c0_0 = arith.constant 0 : index
    %0 = vector.load %arg2[%c0, %c0_0] : memref<8x256xf32, #tpu.memory_space<vmem>>, vector<8x256xf32>
    %c0_1 = arith.constant 0 : index
    %c0_2 = arith.constant 0 : index
    %1 = vector.load %arg3[%c0_1, %c0_2] : memref<8x128xf32, #tpu.memory_space<vmem>>, vector<8x128xf32>
    %2 = tpu.concatenate %1, %1 in 1 : vector<8x128xf32>, vector<8x128xf32> -> vector<8x256xf32>
    %3 = arith.addf %0, %2 : vector<8x256xf32>
    %c0_3 = arith.constant 0 : index
    %c0_4 = arith.constant 0 : index
    %4 = vector.load %arg4[%c0_3, %c0_4] : memref<8x256xf32, #tpu.memory_space<vmem>>, vector<8x256xf32>
    tpu.vector_store %arg4[%c0_3, %c0_4], %3 {strides = array<i32>} : memref<8x256xf32, #tpu.memory_space<vmem>>, vector<8x256xf32>,
    return
  }
  func.func @transform_0(%arg0: i32, %arg1: i32) -> (i32, i32) {
    %c0_i32 = arith.constant 0 : i32
    return %arg0, %arg1 : i32, i32
  }
  func.func @transform_1(%arg0: i32, %arg1: i32) -> (i32, i32) {
    %c0_i32 = arith.constant 0 : i32
    %c0_i32_0 = arith.constant 0 : i32
    return %arg0, %c0_i32 : i32, i32
  }
  func.func @transform_2(%arg0: i32, %arg1: i32) -> (i32, i32) {
    %c0_i32 = arith.constant 0 : i32
    return %arg0, %arg1 : i32, i32
  }
}

</mosaic_0001>

<llo_original>
// kernel: tpu_custom_call.1
$region0: #{tpu_custom_call.1}
  #allocation0 [shape = 'u32[]', space=smem, size = 0x4, offset = 0x4, fixed_abs, tag = 'smem constant byte address 0x4 - core index']
  #allocation1 [shape = 'u32[72,128]{1,0:T(1,128)}', space=vmem, size = 0x9000, scoped, tag = 'internal scratch']
  %s0 = inlined_call_operand.hbm [shape: f32[8,256], index: 0, kind: input, shape index: {}, may-alias: {0,2}]
  %s1 = inlined_call_operand.vmem [shape: f32[8,128], index: 1, kind: input, shape index: {}]
  %s2 = inlined_call_operand.hbm [shape: f32[8,256], index: 2, kind: output, shape index: {}, may-alias: {0,2}]
  %s3 = sld [smem:[#allocation0]]
  $region22: #{tpu_custom_call.1} parent=0
    _
  %s5 = ssub.s32 1, %s3
  %s6 = scalar_select 0, %s5, %s3
  $region1: #{tpu_custom_call.1} parent=0
    #allocation2 [shape = 'u8[8192]{0}', space=vmem, size = 0x2000, scoped, tag = 'input window, operand 0, single buffered']
    #allocation3 [shape = 's32[1]{0}', space=sflag, size = 0x4, scoped, tag = 'scoped memory for tpu_custom_call.1']
    #allocation4 [shape = 's32[1]{0}', space=sflag, size = 0x4, scoped, tag = 'scoped memory for tpu_custom_call.1']
    #allocation5 [shape = 'u8[8192]{0}', space=vmem, size = 0x2000, scoped, tag = 'output window, operand 0, single buffered']
    %7 = vsyncpa [#allocation3], 0
    %8 = vsyncpa [#allocation4], 0
    // Predicated region
    $region2: #{tpu_custom_call.1} parent=1 // pred_check
      _
    $region3: #{tpu_custom_call.1} parent=1 // pred_check_branch
      %10 = sbr.rel (0) target = $region5
    $region4: #{tpu_custom_call.1} parent=1 // pred_region
      %12 = vsyncadd [#allocation3], 0
      %s14 = sshll.u32 %s0, 4
      %s15 = int_to_ptr.hbm [resolvable:$true] %s14
      %s16 = sshll.u32 [#allocation2], 4
      %s17 = int_to_ptr.vmem [resolvable:$true] %s16
      %19 = dma.hbm_to_vmem [thread:$0]  %s15, 256, %s17, [#allocation3]
    $region5: #{tpu_custom_call.1} parent=1 // pred_fallthru
      _
    // Predicated region
    $region6: #{tpu_custom_call.1} parent=1 // pred_check
      _
    $region7: #{tpu_custom_call.1} parent=1 // pred_check_branch
      %21 = sbr.rel (0) target = $region9
    $region8: #{tpu_custom_call.1} parent=1 // pred_region
      _
    $region9: #{tpu_custom_call.1} parent=1 // pred_fallthru
      _
    // Predicated region
    $region10: #{tpu_custom_call.1} parent=1 // pred_check
      _
    $region11: #{tpu_custom_call.1} parent=1 // pred_check_branch
      %23 = sbr.rel (0) target = $region13
    $region12: #{tpu_custom_call.1} parent=1 // pred_region
      %25 = dma.done [#allocation3], 256
    $region13: #{tpu_custom_call.1} parent=1 // pred_fallthru
      _
    %v26 = vld [vmem:[#allocation2] sm:$0xff]
    %v27 = vld [vmem:[#allocation2 + $0x8] sm:$0xff]
    %v28 = vld [vmem:[%s1] sm:$0xff]
    %v29 = vadd.f32 %v26, %v28
    %v30 = vadd.f32 %v27, %v28
    %31 = vst [vmem:[#allocation5] sm:$0xff] %v29
    %32 = vst [vmem:[#allocation5 + $0x8] sm:$0xff] %v30
    // Predicated region
    $region14: #{tpu_custom_call.1} parent=1 // pred_check
      _
    $region15: #{tpu_custom_call.1} parent=1 // pred_check_branch
      %34 = sbr.rel (0) target = $region17
    $region16: #{tpu_custom_call.1} parent=1 // pred_region
      %36 = vsyncadd [#allocation4], 0
      %s38 = sshll.u32 [#allocation5], 4
      %s39 = int_to_ptr.vmem [resolvable:$true] %s38
      %s40 = sshll.u32 %s2, 4
      %s41 = int_to_ptr.hbm [resolvable:$true] %s40
      %43 = dma.vmem_to_hbm [thread:$0]  %s39, 256, %s41, [#allocation4]
    $region17: #{tpu_custom_call.1} parent=1 // pred_fallthru
      _
    // Predicated region
    $region18: #{tpu_custom_call.1} parent=1 // pred_check
      _
    $region19: #{tpu_custom_call.1} parent=1 // pred_check_branch
      %45 = sbr.rel (0) target = $region21
    $region20: #{tpu_custom_call.1} parent=1 // pred_region
      %47 = dma.done [#allocation4], 256
    $region21: #{tpu_custom_call.1} parent=1 // pred_fallthru
      _
    %48 = vsyncpa [#allocation3], 1
    %49 = vsyncpa [#allocation4], 1

</llo_original>
